<compile_context>
chip_gen: v7x
topology: tpu7x:2x2x1
jax: 0.10.0
libtpu: 0.0.40
codegen_flags: <defaults>
</compile_context>

<pallas_src>
import functools

import jax
import jax.numpy as jnp
from jax.experimental import pallas as pl
from jax.experimental.pallas import tpu as pltpu

PAD_F = 128            # lane-dense internal feature width (one vreg lane span)
BATCH_BLOCK = 1024     # max batch tile (sweep 512-2048 for very large batches)


# --------------------------------------------------------------------------- #
# Parameter init (PyTorch nn.Linear shapes) + one-time packing for the kernel
# --------------------------------------------------------------------------- #
def init_encnet_params(key, input_size: int, layers: int, hidden_size: int):
    """Deterministic init matching nn.Linear shapes: weight (out, in), bias (out,)."""
    params = {"encoder": [], "decoder": []}
    for name in ("encoder", "decoder"):
        for i in range(layers):
            in_count = hidden_size
            out_count = hidden_size
            if i == 0:
                in_count = input_size
            if i + 1 == layers:
                out_count = input_size
            key, kw, kb = jax.random.split(key, 3)
            bound = 1.0 / jnp.sqrt(jnp.float32(in_count))
            w = jax.random.uniform(kw, (out_count, in_count), jnp.float32,
                                   minval=-bound, maxval=bound)
            b = jax.random.uniform(kb, (out_count,), jnp.float32,
                                   minval=-bound, maxval=bound)
            params[name].append((w, b))
    return params


def pack_encnet_params(params, *, pad_f: int = PAD_F):
    """One-time packing (outside the forward path):
       transpose each nn.Linear weight to (in, out), zero-pad to (pad_f, pad_f),
       stack encoder then decoder into one (2*layers, pad_f, pad_f) array and
       cast the weights to bf16 (MXU-native on all generations; halves the
       weight VMEM/DMA bytes). Biases stay f32, zero-padded to (2*layers, 1, pad_f).

       Zero padding is exact: padded input columns are 0, padded weight rows are
       0, so padded output columns carry only sigmoid(0)=0.5 values that are
       annihilated by the next layer's zero weight rows; the valid output
       columns match the unpadded computation (up to bf16 matmul rounding)."""
    all_layers = list(params["encoder"]) + list(params["decoder"])
    num = len(all_layers)
    wts = jnp.zeros((num, pad_f, pad_f), jnp.float32)
    biases = jnp.zeros((num, 1, pad_f), jnp.float32)
    for i, (w, b) in enumerate(all_layers):
        out_c, in_c = w.shape
        wts = wts.at[i, :in_c, :out_c].set(w.T)      # pre-transposed once
        biases = biases.at[i, 0, :out_c].set(b)
    return wts.astype(jnp.bfloat16), biases


def _stack_plan(base: int, n_layers: int):
    """Execution plan for one encode/decode stack: (stacked-layer index, sigmoid?).

    Mirrors EncNet.encode/decode exactly:
        sigmoid(layer[0](x)); for layer[1:-1]: dropout(id) + sigmoid(layer(x));
        layer[-1](x)  (no activation)
    Note: for n_layers == 1 PyTorch applies layer[0] twice (with then without
    sigmoid); this plan reproduces that faithfully."""
    plan = [(base, True)]
    for i in range(1, n_layers - 1):
        plan.append((base + i, True))
    plan.append((base + n_layers - 1, False))
    return plan


# --------------------------------------------------------------------------- #
# Fused kernel: every layer of encode + decode in one pallas_call
# --------------------------------------------------------------------------- #
def _encnet_fused_kernel(x_ref, w_ref, b_ref, o_ref, *, plan, out_dim):
    # x: (TB, input_size) f32 (unpadded features)
    # w: (2L, 128, 128) bf16, pre-transposed (in, out), resident in VMEM
    # b: (2L, 1, 128) f32, resident in VMEM
    act = x_ref[...].astype(jnp.float32)
    for idx, use_sigmoid in plan:               # static unroll over 2*layers GEMMs
        k = act.shape[-1]
        w = w_ref[idx]                          # (128, 128) bf16 tile
        if k < w.shape[0]:
            w = w[:k, :]                        # first layer: K = input_size
        y = jnp.dot(act.astype(jnp.bfloat16), w,
                    preferred_element_type=jnp.float32)   # MXU bf16 x bf16 -> f32
        y = y + b_ref[idx]                      # f32 bias add on VPU
        if use_sigmoid:
            y = jax.nn.sigmoid(y)               # f32 logistic -> EUP slot
        act = y
    # Store only the valid columns: avoids a post-kernel HBM slice copy.
    o_ref[...] = act[:, :out_dim].astype(o_ref.dtype)


def encnet_forward(wts, biases, x, *, layers: int, input_size: int):
    """Full EncNet forward (encode -> decode) as a single fused Pallas kernel."""
    m, f = x.shape
    assert f == input_size
    n_stacked = wts.shape[0]
    assert n_stacked == 2 * layers

    # Batch tiling: pad batch to a sublane multiple only (no feature padding).
    pb = max(8, ((m + 7) // 8) * 8)
    if pb > 8:
        # Guarantee >= 2 grid steps so the "parallel" axis can shard across
        # v7x's two TensorCores; capped at BATCH_BLOCK to amortize step overhead.
        half = (((pb + 1) // 2) + 7) // 8 * 8
        tb = min(BATCH_BLOCK, half)
    else:
        tb = pb
    pb = ((pb + tb - 1) // tb) * tb
    xp = x if pb == m else jnp.pad(x, ((0, pb - m), (0, 0)))

    plan = _stack_plan(0, layers) + _stack_plan(layers, layers)
    n_sig = sum(1 for _, s in plan if s)
    kernel = functools.partial(_encnet_fused_kernel, plan=plan, out_dim=input_size)

    cost = pl.CostEstimate(
        flops=2 * len(plan) * pb * PAD_F * PAD_F,
        transcendentals=n_sig * pb * PAD_F,
        bytes_accessed=(pb * input_size * 4          # input read
                        + wts.size * 2               # bf16 weights
                        + biases.size * 4            # f32 biases
                        + pb * input_size * 4),      # output write
    )

    out = pl.pallas_call(
        kernel,
        out_shape=jax.ShapeDtypeStruct((pb, input_size), x.dtype),
        grid=(pb // tb,),
        in_specs=[
            # batch tile, unpadded features (last dim == full array dim)
            pl.BlockSpec((tb, input_size), lambda i: (i, 0)),
            # grid-invariant weights/biases: whole array resident in VMEM,
            # single copy (no double-buffering / pipeline bookkeeping)
            pl.BlockSpec(memory_space=pltpu.MemorySpace.VMEM),
            pl.BlockSpec(memory_space=pltpu.MemorySpace.VMEM),
        ],
        out_specs=pl.BlockSpec((tb, input_size), lambda i: (i, 0)),
        compiler_params=pltpu.CompilerParams(
            dimension_semantics=("parallel",)),      # megacore split on v7x
        cost_estimate=cost,
    )(xp, wts, biases)
    return out if pb == m else out[:m]


# --------------------------------------------------------------------------- #
# Pure-JAX reference (PyTorch eval semantics, f32) for correctness checking
# --------------------------------------------------------------------------- #
def encnet_forward_ref(params, x):
    def stack(x, layer_params):
        w, b = layer_params[0]
        x = jax.nn.sigmoid(x @ w.T + b)
        for w, b in layer_params[1:-1]:
            x = jax.nn.sigmoid(x @ w.T + b)
        w, b = layer_params[-1]
        return x @ w.T + b
    return stack(stack(x, params["encoder"]), params["decoder"])


if __name__ == "__main__":
    INPUT_SIZE = 16
    LAYERS = 3
    HIDDEN_SIZE = 32
    BATCH = 8

    key = jax.random.PRNGKey(0)
    kp, kx = jax.random.split(key)
    params = init_encnet_params(kp, INPUT_SIZE, LAYERS, HIDDEN_SIZE)
    x = jax.random.normal(kx, (BATCH, INPUT_SIZE), jnp.float32)

    # One-time packing (pre-transposed, lane-padded, bf16, stacked) -- not per forward.
    wts, biases = pack_encnet_params(params)

    fwd = jax.jit(functools.partial(encnet_forward,
                                    layers=LAYERS, input_size=INPUT_SIZE))
    out = jax.block_until_ready(fwd(wts, biases, x))
    ref = jax.block_until_ready(encnet_forward_ref(params, x))

    assert out.shape == (BATCH, INPUT_SIZE), out.shape
    # bf16 matmul operands -> relaxed tolerance vs. the f32 reference.
    assert jnp.allclose(out, ref, atol=2e-2, rtol=2e-2), "mismatch vs reference"
    print("KERNEL_OK")
</pallas_src>

<mosaic_0001>
module attributes {stable_mosaic.version = 11 : i64} {
  func.func @_encnet_fused_kernel(%arg0: i32, %arg1: memref<8x16xf32, #tpu.memory_space<vmem>>, %arg2: memref<6x128x128xbf16, #tpu.memory_space<vmem>>, %arg3: memref<6x1x128xf32, #tpu.memory_space<vmem>>, %arg4: memref<8x16xf32, #tpu.memory_space<vmem>>) attributes {dimension_semantics = [#tpu.dimension_semantics<parallel>], iteration_bounds = array<i64: 1>, scalar_prefetch = 0 : i64, scratch_operands = 0 : i64, tpu.core_type = #tpu.core_type<tc>, window_params = [{transform_indices = @transform_0, window_bounds = array<i64: 8, 16>}, {pipeline_mode = #tpu.pipeline_mode<synchronous>, transform_indices = @transform_1, window_bounds = array<i64: 6, 128, 128>}, {pipeline_mode = #tpu.pipeline_mode<synchronous>, transform_indices = @transform_2, window_bounds = array<i64: 6, 1, 128>}, {transform_indices = @transform_3, window_bounds = array<i64: 8, 16>}]} {
    %c0 = arith.constant 0 : index
    %c0_0 = arith.constant 0 : index
    %0 = vector.load %arg1[%c0, %c0_0] : memref<8x16xf32, #tpu.memory_space<vmem>>, vector<8x16xf32>
    %c0_1 = arith.constant 0 : index
    %c0_2 = arith.constant 0 : index
    %c0_3 = arith.constant 0 : index
    %1 = vector.load %arg2[%c0_1, %c0_2, %c0_3] : memref<6x128x128xbf16, #tpu.memory_space<vmem>>, vector<1x128x128xbf16>
    %2 = vector.shape_cast %1 : vector<1x128x128xbf16> to vector<128x128xbf16>
    %3 = vector.extract_strided_slice %2 {offsets = [0, 0], sizes = [16, 128], strides = [1, 1]} : vector<128x128xbf16> to vector<16x128xbf16>
    %4 = arith.truncf %0 : vector<8x16xf32> to vector<8x16xbf16>
    %cst = arith.constant dense<0.000000e+00> : vector<8x128xf32>
    %5 = tpu.matmul %4, %3, %cst {dimension_numbers = #tpu.dot_dimension_numbers<[1], [0], [0], [1], [0, 0, 1, 1], [], []>} : vector<8x16xbf16>, vector<16x128xbf16>, vector<8x128xf32> -> vector<8x128xf32>
    %c0_4 = arith.constant 0 : index
    %c0_5 = arith.constant 0 : index
    %c0_6 = arith.constant 0 : index
    %6 = vector.load %arg3[%c0_4, %c0_5, %c0_6] : memref<6x1x128xf32, #tpu.memory_space<vmem>>, vector<1x1x128xf32>
    %7 = vector.shape_cast %6 : vector<1x1x128xf32> to vector<1x128xf32>
    %8 = vector.broadcast %7 : vector<1x128xf32> to vector<8x128xf32>
    %9 = arith.addf %5, %8 : vector<8x128xf32>
    %10 = arith.negf %9 : vector<8x128xf32>
    %11 = math.exp %10 : vector<8x128xf32>
    %cst_7 = arith.constant 1.000000e+00 : f32
    %12 = vector.broadcast %cst_7 : f32 to vector<8x128xf32>
    %13 = arith.addf %12, %11 : vector<8x128xf32>
    %14 = arith.divf %12, %13 : vector<8x128xf32>
    %c1 = arith.constant 1 : index
    %c0_8 = arith.constant 0 : index
    %c0_9 = arith.constant 0 : index
    %15 = vector.load %arg2[%c1, %c0_8, %c0_9] : memref<6x128x128xbf16, #tpu.memory_space<vmem>>, vector<1x128x128xbf16>
    %16 = vector.shape_cast %15 : vector<1x128x128xbf16> to vector<128x128xbf16>
    %17 = arith.truncf %14 : vector<8x128xf32> to vector<8x128xbf16>
    %cst_10 = arith.constant dense<0.000000e+00> : vector<8x128xf32>
    %18 = tpu.matmul %17, %16, %cst_10 {dimension_numbers = #tpu.dot_dimension_numbers<[1], [0], [0], [1], [0, 0, 1, 1], [], []>} : vector<8x128xbf16>, vector<128x128xbf16>, vector<8x128xf32> -> vector<8x128xf32>
    %c1_11 = arith.constant 1 : index
    %c0_12 = arith.constant 0 : index
    %c0_13 = arith.constant 0 : index
    %19 = vector.load %arg3[%c1_11, %c0_12, %c0_13] : memref<6x1x128xf32, #tpu.memory_space<vmem>>, vector<1x1x128xf32>
    %20 = vector.shape_cast %19 : vector<1x1x128xf32> to vector<1x128xf32>
    %21 = vector.broadcast %20 : vector<1x128xf32> to vector<8x128xf32>
    %22 = arith.addf %18, %21 : vector<8x128xf32>
    %23 = arith.negf %22 : vector<8x128xf32>
    %24 = math.exp %23 : vector<8x128xf32>
    %cst_14 = arith.constant 1.000000e+00 : f32
    %25 = vector.broadcast %cst_14 : f32 to vector<8x128xf32>
    %26 = arith.addf %25, %24 : vector<8x128xf32>
    %27 = arith.divf %25, %26 : vector<8x128xf32>
    %c2 = arith.constant 2 : index
    %c0_15 = arith.constant 0 : index
    %c0_16 = arith.constant 0 : index
    %28 = vector.load %arg2[%c2, %c0_15, %c0_16] : memref<6x128x128xbf16, #tpu.memory_space<vmem>>, vector<1x128x128xbf16>
    %29 = vector.shape_cast %28 : vector<1x128x128xbf16> to vector<128x128xbf16>
    %30 = arith.truncf %27 : vector<8x128xf32> to vector<8x128xbf16>
    %cst_17 = arith.constant dense<0.000000e+00> : vector<8x128xf32>
    %31 = tpu.matmul %30, %29, %cst_17 {dimension_numbers = #tpu.dot_dimension_numbers<[1], [0], [0], [1], [0, 0, 1, 1], [], []>} : vector<8x128xbf16>, vector<128x128xbf16>, vector<8x128xf32> -> vector<8x128xf32>
    %c2_18 = arith.constant 2 : index
    %c0_19 = arith.constant 0 : index
    %c0_20 = arith.constant 0 : index
    %32 = vector.load %arg3[%c2_18, %c0_19, %c0_20] : memref<6x1x128xf32, #tpu.memory_space<vmem>>, vector<1x1x128xf32>
    %33 = vector.shape_cast %32 : vector<1x1x128xf32> to vector<1x128xf32>
    %34 = vector.broadcast %33 : vector<1x128xf32> to vector<8x128xf32>
    %35 = arith.addf %31, %34 : vector<8x128xf32>
    %c3 = arith.constant 3 : index
    %c0_21 = arith.constant 0 : index
    %c0_22 = arith.constant 0 : index
    %36 = vector.load %arg2[%c3, %c0_21, %c0_22] : memref<6x128x128xbf16, #tpu.memory_space<vmem>>, vector<1x128x128xbf16>
    %37 = vector.shape_cast %36 : vector<1x128x128xbf16> to vector<128x128xbf16>
    %38 = arith.truncf %35 : vector<8x128xf32> to vector<8x128xbf16>
    %cst_23 = arith.constant dense<0.000000e+00> : vector<8x128xf32>
    %39 = tpu.matmul %38, %37, %cst_23 {dimension_numbers = #tpu.dot_dimension_numbers<[1], [0], [0], [1], [0, 0, 1, 1], [], []>} : vector<8x128xbf16>, vector<128x128xbf16>, vector<8x128xf32> -> vector<8x128xf32>
    %c3_24 = arith.constant 3 : index
    %c0_25 = arith.constant 0 : index
    %c0_26 = arith.constant 0 : index
    %40 = vector.load %arg3[%c3_24, %c0_25, %c0_26] : memref<6x1x128xf32, #tpu.memory_space<vmem>>, vector<1x1x128xf32>
    %41 = vector.shape_cast %40 : vector<1x1x128xf32> to vector<1x128xf32>
    %42 = vector.broadcast %41 : vector<1x128xf32> to vector<8x128xf32>
    %43 = arith.addf %39, %42 : vector<8x128xf32>
    %44 = arith.negf %43 : vector<8x128xf32>
    %45 = math.exp %44 : vector<8x128xf32>
    %cst_27 = arith.constant 1.000000e+00 : f32
    %46 = vector.broadcast %cst_27 : f32 to vector<8x128xf32>
    %47 = arith.addf %46, %45 : vector<8x128xf32>
    %48 = arith.divf %46, %47 : vector<8x128xf32>
    %c4 = arith.constant 4 : index
    %c0_28 = arith.constant 0 : index
    %c0_29 = arith.constant 0 : index
    %49 = vector.load %arg2[%c4, %c0_28, %c0_29] : memref<6x128x128xbf16, #tpu.memory_space<vmem>>, vector<1x128x128xbf16>
    %50 = vector.shape_cast %49 : vector<1x128x128xbf16> to vector<128x128xbf16>
    %51 = arith.truncf %48 : vector<8x128xf32> to vector<8x128xbf16>
    %cst_30 = arith.constant dense<0.000000e+00> : vector<8x128xf32>
    %52 = tpu.matmul %51, %50, %cst_30 {dimension_numbers = #tpu.dot_dimension_numbers<[1], [0], [0], [1], [0, 0, 1, 1], [], []>} : vector<8x128xbf16>, vector<128x128xbf16>, vector<8x128xf32> -> vector<8x128xf32>
    %c4_31 = arith.constant 4 : index
    %c0_32 = arith.constant 0 : index
    %c0_33 = arith.constant 0 : index
    %53 = vector.load %arg3[%c4_31, %c0_32, %c0_33] : memref<6x1x128xf32, #tpu.memory_space<vmem>>, vector<1x1x128xf32>
    %54 = vector.shape_cast %53 : vector<1x1x128xf32> to vector<1x128xf32>
    %55 = vector.broadcast %54 : vector<1x128xf32> to vector<8x128xf32>
    %56 = arith.addf %52, %55 : vector<8x128xf32>
    %57 = arith.negf %56 : vector<8x128xf32>
    %58 = math.exp %57 : vector<8x128xf32>
    %cst_34 = arith.constant 1.000000e+00 : f32
    %59 = vector.broadcast %cst_34 : f32 to vector<8x128xf32>
    %60 = arith.addf %59, %58 : vector<8x128xf32>
    %61 = arith.divf %59, %60 : vector<8x128xf32>
    %c5 = arith.constant 5 : index
    %c0_35 = arith.constant 0 : index
    %c0_36 = arith.constant 0 : index
    %62 = vector.load %arg2[%c5, %c0_35, %c0_36] : memref<6x128x128xbf16, #tpu.memory_space<vmem>>, vector<1x128x128xbf16>
    %63 = vector.shape_cast %62 : vector<1x128x128xbf16> to vector<128x128xbf16>
    %64 = arith.truncf %61 : vector<8x128xf32> to vector<8x128xbf16>
    %cst_37 = arith.constant dense<0.000000e+00> : vector<8x128xf32>
    %65 = tpu.matmul %64, %63, %cst_37 {dimension_numbers = #tpu.dot_dimension_numbers<[1], [0], [0], [1], [0, 0, 1, 1], [], []>} : vector<8x128xbf16>, vector<128x128xbf16>, vector<8x128xf32> -> vector<8x128xf32>
    %c5_38 = arith.constant 5 : index
    %c0_39 = arith.constant 0 : index
    %c0_40 = arith.constant 0 : index
    %66 = vector.load %arg3[%c5_38, %c0_39, %c0_40] : memref<6x1x128xf32, #tpu.memory_space<vmem>>, vector<1x1x128xf32>
    %67 = vector.shape_cast %66 : vector<1x1x128xf32> to vector<1x128xf32>
    %68 = vector.broadcast %67 : vector<1x128xf32> to vector<8x128xf32>
    %69 = arith.addf %65, %68 : vector<8x128xf32>
    %70 = vector.extract_strided_slice %69 {offsets = [0, 0], sizes = [8, 16], strides = [1, 1]} : vector<8x128xf32> to vector<8x16xf32>
    %c0_41 = arith.constant 0 : index
    %c0_42 = arith.constant 0 : index
    %71 = vector.load %arg4[%c0_41, %c0_42] : memref<8x16xf32, #tpu.memory_space<vmem>>, vector<8x16xf32>
    tpu.vector_store %arg4[%c0_41, %c0_42], %70 {strides = array<i32>} : memref<8x16xf32, #tpu.memory_space<vmem>>, vector<8x16xf32>,
    return
  }
  func.func @transform_0(%arg0: i32) -> (i32, i32) {
    %c0_i32 = arith.constant 0 : i32
    %c0_i32_0 = arith.constant 0 : i32
    return %arg0, %c0_i32 : i32, i32
  }
  func.func @transform_1(%arg0: i32) -> (i32, i32, i32) {
    %c0_i32 = arith.constant 0 : i32
    %c0_i32_0 = arith.constant 0 : i32
    %c0_i32_1 = arith.constant 0 : i32
    %c0_i32_2 = arith.constant 0 : i32
    return %c0_i32, %c0_i32_0, %c0_i32_1 : i32, i32, i32
  }
  func.func @transform_2(%arg0: i32) -> (i32, i32, i32) {
    %c0_i32 = arith.constant 0 : i32
    %c0_i32_0 = arith.constant 0 : i32
    %c0_i32_1 = arith.constant 0 : i32
    %c0_i32_2 = arith.constant 0 : i32
    return %c0_i32, %c0_i32_0, %c0_i32_1 : i32, i32, i32
  }
  func.func @transform_3(%arg0: i32) -> (i32, i32) {
    %c0_i32 = arith.constant 0 : i32
    %c0_i32_0 = arith.constant 0 : i32
    return %arg0, %c0_i32 : i32, i32
  }
}

</mosaic_0001>

<llo_original>
// kernel: encnet_forward.1
$region0: #{encnet_forward.1}
  #allocation0 [shape = 'u32[]', space=smem, size = 0x4, offset = 0x4, fixed_abs, tag = 'smem constant byte address 0x4 - core index']
  #allocation1 [shape = 'u32[144,128]{1,0:T(1,128)}', space=vmem, size = 0x12000, scoped, tag = 'internal scratch']
  %s0 = inlined_call_operand.hbm [shape: f32[8,16], index: 0, kind: input, shape index: {}]
  %s1 = inlined_call_operand.hbm [shape: bf16[6,128,128], index: 1, kind: input, shape index: {}]
  %s2 = inlined_call_operand.hbm [shape: f32[6,1,128], index: 2, kind: input, shape index: {}]
  %s3 = inlined_call_operand.hbm [shape: f32[8,16], index: 3, kind: output, shape index: {}]
  %s4 = sld [smem:[#allocation0]]
  $region34: #{encnet_forward.1} parent=0
    _
  %s6 = ssub.s32 1, %s4
  %s7 = scalar_select 0, %s6, %s4
  $region1: #{encnet_forward.1} parent=0
    #allocation2 [shape = 'u8[4096]{0}', space=vmem, size = 0x1000, scoped, tag = 'input window, operand 0, single buffered']
    #allocation3 [shape = 's32[1]{0}', space=sflag, size = 0x4, scoped, tag = 'scoped memory for encnet_forward.1']
    #allocation4 [shape = 's32[1]{0}', space=sflag, size = 0x4, scoped, tag = 'scoped memory for encnet_forward.1']
    #allocation5 [shape = 'u8[196608]{0}', space=vmem, size = 0x30000, scoped, tag = 'input window, operand 1, single buffered']
    #allocation6 [shape = 's32[1]{0}', space=sflag, size = 0x4, scoped, tag = 'scoped memory for encnet_forward.1']
    #allocation7 [shape = 'u8[3072]{0}', space=vmem, size = 0xc00, scoped, tag = 'input window, operand 2, single buffered']
    #allocation8 [shape = 'u8[4096]{0}', space=vmem, size = 0x1000, scoped, tag = 'output window, operand 0, single buffered']
    %8 = vsyncpa [#allocation3], 0
    %9 = vsyncpa [#allocation6], 0
    %10 = vsyncpa [#allocation4], 0
    // Predicated region
    $region2: #{encnet_forward.1} parent=1 // pred_check
      _
    $region3: #{encnet_forward.1} parent=1 // pred_check_branch
      %12 = sbr.rel (0) target = $region5
    $region4: #{encnet_forward.1} parent=1 // pred_region
      %s14 = ssub.s32 128, 128
      %15 = vsyncadd [#allocation3], %s14
      %s17 = sshll.u32 [#allocation2], 4
      %s18 = int_to_ptr.vmem [resolvable:$true] %s17
      %20 = dma.hbm_to_vmem [thread:$0]  %s0, 128, %s18, [#allocation3]
    $region5: #{encnet_forward.1} parent=1 // pred_fallthru
      _
    // Predicated region
    $region6: #{encnet_forward.1} parent=1 // pred_check
      _
    $region7: #{encnet_forward.1} parent=1 // pred_check_branch
      %22 = sbr.rel (0) target = $region9
    $region8: #{encnet_forward.1} parent=1 // pred_region
      %s24 = ssub.s32 6144, 6144
      %25 = vsyncadd [#allocation6], %s24
      %s26 = sshll.u32 [#allocation5], 4
      %s27 = int_to_ptr.vmem [resolvable:$true] %s26
      %32 = dma.hbm_to_vmem [thread:$0]  %s1, 6144, %s27, [#allocation6], 64, 64, 4
    $region9: #{encnet_forward.1} parent=1 // pred_fallthru
      _
    // Predicated region
    $region10: #{encnet_forward.1} parent=1 // pred_check
      _
    $region11: #{encnet_forward.1} parent=1 // pred_check_branch
      %34 = sbr.rel (0) target = $region13
    $region12: #{encnet_forward.1} parent=1 // pred_region
      %s36 = ssub.s32 96, 96
      %37 = vsyncadd [#allocation6], %s36
      %s38 = sshll.u32 [#allocation7], 4
      %s39 = int_to_ptr.vmem [resolvable:$true] %s38
      %44 = dma.hbm_to_vmem [thread:$0]  %s2, 96, %s39, [#allocation6], 16, 16, 1
    $region13: #{encnet_forward.1} parent=1 // pred_fallthru
      _
    // Predicated region
    $region14: #{encnet_forward.1} parent=1 // pred_check
      _
    $region15: #{encnet_forward.1} parent=1 // pred_check_branch
      %46 = sbr.rel (0) target = $region17
    $region16: #{encnet_forward.1} parent=1 // pred_region
      %47 = dma.done [#allocation3], 128
    $region17: #{encnet_forward.1} parent=1 // pred_fallthru
      _
    // Predicated region
    $region18: #{encnet_forward.1} parent=1 // pred_check
      _
    $region19: #{encnet_forward.1} parent=1 // pred_check_branch
      %49 = sbr.rel (0) target = $region21
    $region20: #{encnet_forward.1} parent=1 // pred_region
      %50 = dma.done [#allocation6], 6144
    $region21: #{encnet_forward.1} parent=1 // pred_fallthru
      _
    // Predicated region
    $region22: #{encnet_forward.1} parent=1 // pred_check
      _
    $region23: #{encnet_forward.1} parent=1 // pred_check_branch
      %52 = sbr.rel (0) target = $region25
    $region24: #{encnet_forward.1} parent=1 // pred_region
      %53 = dma.done [#allocation6], 96
    $region25: #{encnet_forward.1} parent=1 // pred_fallthru
      _
    %v55 = vld [vmem:[#allocation2] sm:$0xff]
    %v56 = vld [vmem:[#allocation5] sm:$0xf]
    %v57 = vld [vmem:[#allocation5 + $0x4] sm:$0xf]
    %v58 = vpack.c.bf16 %v55, %v55
    %v59 = vld [vmem:[#allocation7] sm:$0x1]
    %v61 = vlaneseq
    %v62 = vshrl.u32 %v61, 7
    %v63 = vsub.s32 0, %v62
    %v64 = vrot.slane %v59, %v63
    %v68 = vunpack.c.l.b16 %v56
    %v69 = vunpack.c.l.b16 %v57
    %v70 = vpack.c.b16 %v69, %v68
    %vm72 = vcmask 130048
    %v74 = vsel %vm72, %v58, 0
    %76 = vmatprep.subr.bf16.mxu0 0
    %77 = vmatpush1.bf16.msra.mxu0 %v70
    %78 = vmatprep.subr.bf16.mxu0 0
    %79 = vmatpush1.bf16.msra.mxu0 0
    %80 = vmatprep.subr.bf16.mxu0 0
    %81 = vmatpush1.bf16.msra.mxu0 0
    %82 = vmatprep.subr.bf16.mxu0 0
    %83 = vmatpush1.bf16.msra.mxu0 0
    %84 = vmatprep.subr.bf16.mxu0 0
    %85 = vmatpush1.bf16.msra.mxu0 0
    %86 = vmatprep.subr.bf16.mxu0 0
    %87 = vmatpush1.bf16.msra.mxu0 0
    %88 = vmatprep.subr.bf16.mxu0 0
    %89 = vmatpush1.bf16.msra.mxu0 0
    %90 = vmatprep.subr.bf16.mxu0 0
    %91 = vmatpush1.bf16.msra.mxu0 0
    %92 = vmatprep.subr.bf16.mxu0 0
    %93 = vmatpush1.bf16.msra.mxu0 0
    %94 = vmatprep.subr.bf16.mxu0 0
    %95 = vmatpush1.bf16.msra.mxu0 0
    %96 = vmatprep.subr.bf16.mxu0 0
    %97 = vmatpush1.bf16.msra.mxu0 0
    %98 = vmatprep.subr.bf16.mxu0 0
    %99 = vmatpush1.bf16.msra.mxu0 0
    %100 = vmatprep.subr.bf16.mxu0 0
    %101 = vmatpush1.bf16.msra.mxu0 0
    %102 = vmatprep.subr.bf16.mxu0 0
    %103 = vmatpush1.bf16.msra.mxu0 0
    %104 = vmatprep.subr.bf16.mxu0 0
    %105 = vmatpush1.bf16.msra.mxu0 0
    %106 = vmatprep.subr.bf16.mxu0 0
    %107 = vmatpush1.bf16.msra.mxu0 0
    %108 = vmatprep.mubr.bf16.mxu0 0
    %109 = vmatmul.mubr.bf16.gmra.mrb[0].mxu0 %v74
    %v110 = vpop.f32.mrb[0].mxu0
    %v111 = vadd.f32 %v64, %v110
    %v112 = vpop.f32.mrb[0].mxu0
    %v113 = vpop.f32.mrb[0].mxu0
    %v114 = vpop.f32.mrb[0].mxu0
    %115 = vdwg.mxu0
    %v116 = vxor.u32 %v111, 2147483648
    %v117 = vmul.f32 %v116, 1.442695
    %v118 = vpow.pop %v117
    %v119 = vadd.f32 %v118, 1.0
    %v120 = vrcp.pop %v119
    %v121 = vmul.f32 1.0, %v120
    %s122 = scalar_lea.vmem [#allocation5], 64
    %v123 = vld [vmem:[%s122] sm:$0xf]
    %v124 = vld [vmem:[%s122 + $0x4] sm:$0xf]
    %v125 = vld [vmem:[%s122 + $0x8] sm:$0xf]
    %v126 = vld [vmem:[%s122 + $0xc] sm:$0xf]
    %v127 = vld [vmem:[%s122 + $0x10] sm:$0xf]
    %v128 = vld [vmem:[%s122 + $0x14] sm:$0xf]
    %v129 = vld [vmem:[%s122 + $0x18] sm:$0xf]
    %v130 = vld [vmem:[%s122 + $0x1c] sm:$0xf]
    %v131 = vld [vmem:[%s122 + $0x20] sm:$0xf]
    %v132 = vld [vmem:[%s122 + $0x24] sm:$0xf]
    %v133 = vld [vmem:[%s122 + $0x28] sm:$0xf]
    %v134 = vld [vmem:[%s122 + $0x2c] sm:$0xf]
    %v135 = vld [vmem:[%s122 + $0x30] sm:$0xf]
    %v136 = vld [vmem:[%s122 + $0x34] sm:$0xf]
    %v137 = vld [vmem:[%s122 + $0x38] sm:$0xf]
    %v138 = vld [vmem:[%s122 + $0x3c] sm:$0xf]
    %v139 = vpack.c.bf16 %v121, %v121
    %s140 = scalar_lea.vmem [#allocation7], 1
    %v141 = vld [vmem:[%s140] sm:$0x1]
    %v143 = vlaneseq
    %v144 = vshrl.u32 %v143, 7
    %v145 = vsub.s32 0, %v144
    %v146 = vrot.slane %v141, %v145
    %v164 = vunpack.c.l.b16 %v123
    %v165 = vunpack.c.l.b16 %v124
    %v166 = vunpack.c.l.b16 %v125
    %v167 = vunpack.c.l.b16 %v126
    %v168 = vunpack.c.l.b16 %v127
    %v169 = vunpack.c.l.b16 %v128
    %v170 = vunpack.c.l.b16 %v129
    %v171 = vunpack.c.l.b16 %v130
    %v172 = vunpack.c.l.b16 %v131
    %v173 = vunpack.c.l.b16 %v132
    %v174 = vunpack.c.l.b16 %v133
    %v175 = vunpack.c.l.b16 %v134
    %v176 = vunpack.c.l.b16 %v135
    %v177 = vunpack.c.l.b16 %v136
    %v178 = vunpack.c.l.b16 %v137
    %v179 = vunpack.c.l.b16 %v138
    %v180 = vpack.c.b16 %v165, %v164
    %v181 = vpack.c.b16 %v167, %v166
    %v182 = vpack.c.b16 %v169, %v168
    %v183 = vpack.c.b16 %v171, %v170
    %v184 = vpack.c.b16 %v173, %v172
    %v185 = vpack.c.b16 %v175, %v174
    %v186 = vpack.c.b16 %v177, %v176
    %v187 = vpack.c.b16 %v179, %v178
    %196 = vmatprep.subr.bf16.mxu0 0
    %197 = vmatpush1.bf16.msra.mxu0 %v180
    %198 = vmatprep.subr.bf16.mxu0 0
    %199 = vmatpush1.bf16.msra.mxu0 %v181
    %200 = vmatprep.subr.bf16.mxu0 0
    %201 = vmatpush1.bf16.msra.mxu0 %v182
    %202 = vmatprep.subr.bf16.mxu0 0
    %203 = vmatpush1.bf16.msra.mxu0 %v183
    %204 = vmatprep.subr.bf16.mxu0 0
    %205 = vmatpush1.bf16.msra.mxu0 %v184
    %206 = vmatprep.subr.bf16.mxu0 0
    %207 = vmatpush1.bf16.msra.mxu0 %v185
    %208 = vmatprep.subr.bf16.mxu0 0
    %209 = vmatpush1.bf16.msra.mxu0 %v186
    %210 = vmatprep.subr.bf16.mxu0 0
    %211 = vmatpush1.bf16.msra.mxu0 %v187
    %212 = vmatprep.subr.bf16.mxu0 0
    %213 = vmatpush1.bf16.msra.mxu0 0
    %214 = vmatprep.subr.bf16.mxu0 0
    %215 = vmatpush1.bf16.msra.mxu0 0
    %216 = vmatprep.subr.bf16.mxu0 0
    %217 = vmatpush1.bf16.msra.mxu0 0
    %218 = vmatprep.subr.bf16.mxu0 0
    %219 = vmatpush1.bf16.msra.mxu0 0
    %220 = vmatprep.subr.bf16.mxu0 0
    %221 = vmatpush1.bf16.msra.mxu0 0
    %222 = vmatprep.subr.bf16.mxu0 0
    %223 = vmatpush1.bf16.msra.mxu0 0
    %224 = vmatprep.subr.bf16.mxu0 0
    %225 = vmatpush1.bf16.msra.mxu0 0
    %226 = vmatprep.subr.bf16.mxu0 0
    %227 = vmatpush1.bf16.msra.mxu0 0
    %228 = vmatprep.mubr.bf16.mxu0 0
    %229 = vmatmul.mubr.bf16.gmra.mrb[0].mxu0 %v139
    %v230 = vpop.f32.mrb[0].mxu0
    %v231 = vadd.f32 %v146, %v230
    %v232 = vpop.f32.mrb[0].mxu0
    %v233 = vpop.f32.mrb[0].mxu0
    %v234 = vpop.f32.mrb[0].mxu0
    %235 = vdwg.mxu0
    %v236 = vxor.u32 %v231, 2147483648
    %v237 = vmul.f32 %v236, 1.442695
    %v238 = vpow.pop %v237
    %v239 = vadd.f32 %v238, 1.0
    %v240 = vrcp.pop %v239
    %v241 = vmul.f32 1.0, %v240
    %s242 = scalar_lea.vmem [#allocation5], 128
    %v243 = vld [vmem:[%s242] sm:$0xf]
    %v244 = vld [vmem:[%s242 + $0x4] sm:$0xf]
    %v245 = vld [vmem:[%s242 + $0x8] sm:$0xf]
    %v246 = vld [vmem:[%s242 + $0xc] sm:$0xf]
    %v247 = vld [vmem:[%s242 + $0x10] sm:$0xf]
    %v248 = vld [vmem:[%s242 + $0x14] sm:$0xf]
    %v249 = vld [vmem:[%s242 + $0x18] sm:$0xf]
    %v250 = vld [vmem:[%s242 + $0x1c] sm:$0xf]
    %v251 = vld [vmem:[%s242 + $0x20] sm:$0xf]
    %v252 = vld [vmem:[%s242 + $0x24] sm:$0xf]
    %v253 = vld [vmem:[%s242 + $0x28] sm:$0xf]
    %v254 = vld [vmem:[%s242 + $0x2c] sm:$0xf]
    %v255 = vld [vmem:[%s242 + $0x30] sm:$0xf]
    %v256 = vld [vmem:[%s242 + $0x34] sm:$0xf]
    %v257 = vld [vmem:[%s242 + $0x38] sm:$0xf]
    %v258 = vld [vmem:[%s242 + $0x3c] sm:$0xf]
    %v259 = vpack.c.bf16 %v241, %v241
    %s260 = scalar_lea.vmem [#allocation7], 2
    %v261 = vld [vmem:[%s260] sm:$0x1]
    %v263 = vlaneseq
    %v264 = vshrl.u32 %v263, 7
    %v265 = vsub.s32 0, %v264
    %v266 = vrot.slane %v261, %v265
    %v284 = vunpack.c.l.b16 %v243
    %v285 = vunpack.c.l.b16 %v244
    %v286 = vunpack.c.l.b16 %v245
    %v287 = vunpack.c.l.b16 %v246
    %v288 = vunpack.c.l.b16 %v247
    %v289 = vunpack.c.l.b16 %v248
    %v290 = vunpack.c.l.b16 %v249
    %v291 = vunpack.c.l.b16 %v250
    %v292 = vunpack.c.l.b16 %v251
    %v293 = vunpack.c.l.b16 %v252
    %v294 = vunpack.c.l.b16 %v253
    %v295 = vunpack.c.l.b16 %v254
    %v296 = vunpack.c.l.b16 %v255
    %v297 = vunpack.c.l.b16 %v256
    %v298 = vunpack.c.l.b16 %v257
    %v299 = vunpack.c.l.b16 %v258
    %v300 = vpack.c.b16 %v285, %v284
    %v301 = vpack.c.b16 %v287, %v286
    %v302 = vpack.c.b16 %v289, %v288
    %v303 = vpack.c.b16 %v291, %v290
    %v304 = vpack.c.b16 %v293, %v292
    %v305 = vpack.c.b16 %v295, %v294
    %v306 = vpack.c.b16 %v297, %v296
    %v307 = vpack.c.b16 %v299, %v298
    %316 = vmatprep.subr.bf16.mxu0 0
    %317 = vmatpush1.bf16.msra.mxu0 %v300
    %318 = vmatprep.subr.bf16.mxu0 0
    %319 = vmatpush1.bf16.msra.mxu0 %v301
    %320 = vmatprep.subr.bf16.mxu0 0
    %321 = vmatpush1.bf16.msra.mxu0 %v302
    %322 = vmatprep.subr.bf16.mxu0 0
    %323 = vmatpush1.bf16.msra.mxu0 %v303
    %324 = vmatprep.subr.bf16.mxu0 0
    %325 = vmatpush1.bf16.msra.mxu0 %v304
    %326 = vmatprep.subr.bf16.mxu0 0
    %327 = vmatpush1.bf16.msra.mxu0 %v305
    %328 = vmatprep.subr.bf16.mxu0 0
    %329 = vmatpush1.bf16.msra.mxu0 %v306
    %330 = vmatprep.subr.bf16.mxu0 0
    %331 = vmatpush1.bf16.msra.mxu0 %v307
    %332 = vmatprep.subr.bf16.mxu0 0
    %333 = vmatpush1.bf16.msra.mxu0 0
    %334 = vmatprep.subr.bf16.mxu0 0
    %335 = vmatpush1.bf16.msra.mxu0 0
    %336 = vmatprep.subr.bf16.mxu0 0
    %337 = vmatpush1.bf16.msra.mxu0 0
    %338 = vmatprep.subr.bf16.mxu0 0
    %339 = vmatpush1.bf16.msra.mxu0 0
    %340 = vmatprep.subr.bf16.mxu0 0
    %341 = vmatpush1.bf16.msra.mxu0 0
    %342 = vmatprep.subr.bf16.mxu0 0
    %343 = vmatpush1.bf16.msra.mxu0 0
    %344 = vmatprep.subr.bf16.mxu0 0
    %345 = vmatpush1.bf16.msra.mxu0 0
    %346 = vmatprep.subr.bf16.mxu0 0
    %347 = vmatpush1.bf16.msra.mxu0 0
    %348 = vmatprep.mubr.bf16.mxu0 0
    %349 = vmatmul.mubr.bf16.gmra.mrb[0].mxu0 %v259
    %v350 = vpop.f32.mrb[0].mxu0
    %v351 = vadd.f32 %v266, %v350
    %v352 = vpop.f32.mrb[0].mxu0
    %v353 = vpop.f32.mrb[0].mxu0
    %v354 = vpop.f32.mrb[0].mxu0
    %355 = vdwg.mxu0
    %s356 = scalar_lea.vmem [#allocation5], 192
    %v357 = vld [vmem:[%s356] sm:$0xf]
    %v358 = vld [vmem:[%s356 + $0x4] sm:$0xf]
    %v359 = vld [vmem:[%s356 + $0x8] sm:$0xf]
    %v360 = vld [vmem:[%s356 + $0xc] sm:$0xf]
    %v361 = vld [vmem:[%s356 + $0x10] sm:$0xf]
    %v362 = vld [vmem:[%s356 + $0x14] sm:$0xf]
    %v363 = vld [vmem:[%s356 + $0x18] sm:$0xf]
    %v364 = vld [vmem:[%s356 + $0x1c] sm:$0xf]
    %v365 = vld [vmem:[%s356 + $0x20] sm:$0xf]
    %v366 = vld [vmem:[%s356 + $0x24] sm:$0xf]
    %v367 = vld [vmem:[%s356 + $0x28] sm:$0xf]
    %v368 = vld [vmem:[%s356 + $0x2c] sm:$0xf]
    %v369 = vld [vmem:[%s356 + $0x30] sm:$0xf]
    %v370 = vld [vmem:[%s356 + $0x34] sm:$0xf]
    %v371 = vld [vmem:[%s356 + $0x38] sm:$0xf]
    %v372 = vld [vmem:[%s356 + $0x3c] sm:$0xf]
    %v373 = vpack.c.bf16 %v351, %v351
    %s374 = scalar_lea.vmem [#allocation7], 3
    %v375 = vld [vmem:[%s374] sm:$0x1]
    %v377 = vlaneseq
    %v378 = vshrl.u32 %v377, 7
    %v379 = vsub.s32 0, %v378
    %v380 = vrot.slane %v375, %v379
    %v398 = vunpack.c.l.b16 %v357
    %v399 = vunpack.c.l.b16 %v358
    %v400 = vunpack.c.l.b16 %v359
    %v401 = vunpack.c.l.b16 %v360
    %v402 = vunpack.c.l.b16 %v361
    %v403 = vunpack.c.l.b16 %v362
    %v404 = vunpack.c.l.b16 %v363
    %v405 = vunpack.c.l.b16 %v364
    %v406 = vunpack.c.l.b16 %v365
    %v407 = vunpack.c.l.b16 %v366
    %v408 = vunpack.c.l.b16 %v367
    %v409 = vunpack.c.l.b16 %v368
    %v410 = vunpack.c.l.b16 %v369
    %v411 = vunpack.c.l.b16 %v370
    %v412 = vunpack.c.l.b16 %v371
    %v413 = vunpack.c.l.b16 %v372
    %v414 = vpack.c.b16 %v399, %v398
    %v415 = vpack.c.b16 %v401, %v400
    %v416 = vpack.c.b16 %v403, %v402
    %v417 = vpack.c.b16 %v405, %v404
    %v418 = vpack.c.b16 %v407, %v406
    %v419 = vpack.c.b16 %v409, %v408
    %v420 = vpack.c.b16 %v411, %v410
    %v421 = vpack.c.b16 %v413, %v412
    %430 = vmatprep.subr.bf16.mxu0 0
    %431 = vmatpush1.bf16.msra.mxu0 %v414
    %432 = vmatprep.subr.bf16.mxu0 0
    %433 = vmatpush1.bf16.msra.mxu0 %v415
    %434 = vmatprep.subr.bf16.mxu0 0
    %435 = vmatpush1.bf16.msra.mxu0 %v416
    %436 = vmatprep.subr.bf16.mxu0 0
    %437 = vmatpush1.bf16.msra.mxu0 %v417
    %438 = vmatprep.subr.bf16.mxu0 0
    %439 = vmatpush1.bf16.msra.mxu0 %v418
    %440 = vmatprep.subr.bf16.mxu0 0
    %441 = vmatpush1.bf16.msra.mxu0 %v419
    %442 = vmatprep.subr.bf16.mxu0 0
    %443 = vmatpush1.bf16.msra.mxu0 %v420
    %444 = vmatprep.subr.bf16.mxu0 0
    %445 = vmatpush1.bf16.msra.mxu0 %v421
    %446 = vmatprep.subr.bf16.mxu0 0
    %447 = vmatpush1.bf16.msra.mxu0 0
    %448 = vmatprep.subr.bf16.mxu0 0
    %449 = vmatpush1.bf16.msra.mxu0 0
    %450 = vmatprep.subr.bf16.mxu0 0
    %451 = vmatpush1.bf16.msra.mxu0 0
    %452 = vmatprep.subr.bf16.mxu0 0
    %453 = vmatpush1.bf16.msra.mxu0 0
    %454 = vmatprep.subr.bf16.mxu0 0
    %455 = vmatpush1.bf16.msra.mxu0 0
    %456 = vmatprep.subr.bf16.mxu0 0
    %457 = vmatpush1.bf16.msra.mxu0 0
    %458 = vmatprep.subr.bf16.mxu0 0
    %459 = vmatpush1.bf16.msra.mxu0 0
    %460 = vmatprep.subr.bf16.mxu0 0
    %461 = vmatpush1.bf16.msra.mxu0 0
    %462 = vmatprep.mubr.bf16.mxu0 0
    %463 = vmatmul.mubr.bf16.gmra.mrb[0].mxu0 %v373
    %v464 = vpop.f32.mrb[0].mxu0
    %v465 = vadd.f32 %v380, %v464
    %v466 = vpop.f32.mrb[0].mxu0
    %v467 = vpop.f32.mrb[0].mxu0
    %v468 = vpop.f32.mrb[0].mxu0
    %469 = vdwg.mxu0
    %v470 = vxor.u32 %v465, 2147483648
    %v471 = vmul.f32 %v470, 1.442695
    %v472 = vpow.pop %v471
    %v473 = vadd.f32 %v472, 1.0
    %v474 = vrcp.pop %v473
    %v475 = vmul.f32 1.0, %v474
    %s476 = scalar_lea.vmem [#allocation5], 256
    %v477 = vld [vmem:[%s476] sm:$0xf]
    %v478 = vld [vmem:[%s476 + $0x4] sm:$0xf]
    %v479 = vld [vmem:[%s476 + $0x8] sm:$0xf]
    %v480 = vld [vmem:[%s476 + $0xc] sm:$0xf]
    %v481 = vld [vmem:[%s476 + $0x10] sm:$0xf]
    %v482 = vld [vmem:[%s476 + $0x14] sm:$0xf]
    %v483 = vld [vmem:[%s476 + $0x18] sm:$0xf]
    %v484 = vld [vmem:[%s476 + $0x1c] sm:$0xf]
    %v485 = vld [vmem:[%s476 + $0x20] sm:$0xf]
    %v486 = vld [vmem:[%s476 + $0x24] sm:$0xf]
    %v487 = vld [vmem:[%s476 + $0x28] sm:$0xf]
    %v488 = vld [vmem:[%s476 + $0x2c] sm:$0xf]
    %v489 = vld [vmem:[%s476 + $0x30] sm:$0xf]
    %v490 = vld [vmem:[%s476 + $0x34] sm:$0xf]
    %v491 = vld [vmem:[%s476 + $0x38] sm:$0xf]
    %v492 = vld [vmem:[%s476 + $0x3c] sm:$0xf]
    %v493 = vpack.c.bf16 %v475, %v475
    %s494 = scalar_lea.vmem [#allocation7], 4
    %v495 = vld [vmem:[%s494] sm:$0x1]
    %v497 = vlaneseq
    %v498 = vshrl.u32 %v497, 7
    %v499 = vsub.s32 0, %v498
    %v500 = vrot.slane %v495, %v499
    %v518 = vunpack.c.l.b16 %v477
    %v519 = vunpack.c.l.b16 %v478
    %v520 = vunpack.c.l.b16 %v479
    %v521 = vunpack.c.l.b16 %v480
    %v522 = vunpack.c.l.b16 %v481
    %v523 = vunpack.c.l.b16 %v482
    %v524 = vunpack.c.l.b16 %v483
    %v525 = vunpack.c.l.b16 %v484
    %v526 = vunpack.c.l.b16 %v485
    %v527 = vunpack.c.l.b16 %v486
    %v528 = vunpack.c.l.b16 %v487
    %v529 = vunpack.c.l.b16 %v488
    %v530 = vunpack.c.l.b16 %v489
    %v531 = vunpack.c.l.b16 %v490
    %v532 = vunpack.c.l.b16 %v491
    %v533 = vunpack.c.l.b16 %v492
    %v534 = vpack.c.b16 %v519, %v518
    %v535 = vpack.c.b16 %v521, %v520
    %v536 = vpack.c.b16 %v523, %v522
    %v537 = vpack.c.b16 %v525, %v524
    %v538 = vpack.c.b16 %v527, %v526
    %v539 = vpack.c.b16 %v529, %v528
    %v540 = vpack.c.b16 %v531, %v530
    %v541 = vpack.c.b16 %v533, %v532
    %550 = vmatprep.subr.bf16.mxu0 0
    %551 = vmatpush1.bf16.msra.mxu0 %v534
    %552 = vmatprep.subr.bf16.mxu0 0
    %553 = vmatpush1.bf16.msra.mxu0 %v535
    %554 = vmatprep.subr.bf16.mxu0 0
    %555 = vmatpush1.bf16.msra.mxu0 %v536
    %556 = vmatprep.subr.bf16.mxu0 0
    %557 = vmatpush1.bf16.msra.mxu0 %v537
    %558 = vmatprep.subr.bf16.mxu0 0
    %559 = vmatpush1.bf16.msra.mxu0 %v538
    %560 = vmatprep.subr.bf16.mxu0 0
    %561 = vmatpush1.bf16.msra.mxu0 %v539
    %562 = vmatprep.subr.bf16.mxu0 0
    %563 = vmatpush1.bf16.msra.mxu0 %v540
    %564 = vmatprep.subr.bf16.mxu0 0
    %565 = vmatpush1.bf16.msra.mxu0 %v541
    %566 = vmatprep.subr.bf16.mxu0 0
    %567 = vmatpush1.bf16.msra.mxu0 0
    %568 = vmatprep.subr.bf16.mxu0 0
    %569 = vmatpush1.bf16.msra.mxu0 0
    %570 = vmatprep.subr.bf16.mxu0 0
    %571 = vmatpush1.bf16.msra.mxu0 0
    %572 = vmatprep.subr.bf16.mxu0 0
    %573 = vmatpush1.bf16.msra.mxu0 0
    %574 = vmatprep.subr.bf16.mxu0 0
    %575 = vmatpush1.bf16.msra.mxu0 0
    %576 = vmatprep.subr.bf16.mxu0 0
    %577 = vmatpush1.bf16.msra.mxu0 0
    %578 = vmatprep.subr.bf16.mxu0 0
    %579 = vmatpush1.bf16.msra.mxu0 0
    %580 = vmatprep.subr.bf16.mxu0 0
    %581 = vmatpush1.bf16.msra.mxu0 0
    %582 = vmatprep.mubr.bf16.mxu0 0
    %583 = vmatmul.mubr.bf16.gmra.mrb[0].mxu0 %v493
    %v584 = vpop.f32.mrb[0].mxu0
    %v585 = vadd.f32 %v500, %v584
    %v586 = vpop.f32.mrb[0].mxu0
    %v587 = vpop.f32.mrb[0].mxu0
    %v588 = vpop.f32.mrb[0].mxu0
    %589 = vdwg.mxu0
    %v590 = vxor.u32 %v585, 2147483648
    %v591 = vmul.f32 %v590, 1.442695
    %v592 = vpow.pop %v591
    %v593 = vadd.f32 %v592, 1.0
    %v594 = vrcp.pop %v593
    %v595 = vmul.f32 1.0, %v594
    %s596 = scalar_lea.vmem [#allocation5], 320
    %v597 = vld [vmem:[%s596] sm:$0xf]
    %v598 = vld [vmem:[%s596 + $0x4] sm:$0xf]
    %v599 = vld [vmem:[%s596 + $0x8] sm:$0xf]
    %v600 = vld [vmem:[%s596 + $0xc] sm:$0xf]
    %v601 = vld [vmem:[%s596 + $0x10] sm:$0xf]
    %v602 = vld [vmem:[%s596 + $0x14] sm:$0xf]
    %v603 = vld [vmem:[%s596 + $0x18] sm:$0xf]
    %v604 = vld [vmem:[%s596 + $0x1c] sm:$0xf]
    %v605 = vld [vmem:[%s596 + $0x20] sm:$0xf]
    %v606 = vld [vmem:[%s596 + $0x24] sm:$0xf]
    %v607 = vld [vmem:[%s596 + $0x28] sm:$0xf]
    %v608 = vld [vmem:[%s596 + $0x2c] sm:$0xf]
    %v609 = vld [vmem:[%s596 + $0x30] sm:$0xf]
    %v610 = vld [vmem:[%s596 + $0x34] sm:$0xf]
    %v611 = vld [vmem:[%s596 + $0x38] sm:$0xf]
    %v612 = vld [vmem:[%s596 + $0x3c] sm:$0xf]
    %v613 = vpack.c.bf16 %v595, %v595
    %s614 = scalar_lea.vmem [#allocation7], 5
    %v615 = vld [vmem:[%s614] sm:$0x1]
    %v617 = vlaneseq
    %v618 = vshrl.u32 %v617, 7
    %v619 = vsub.s32 0, %v618
    %v620 = vrot.slane %v615, %v619
    %v638 = vunpack.c.l.b16 %v597
    %v639 = vunpack.c.l.b16 %v598
    %v640 = vunpack.c.l.b16 %v599
    %v641 = vunpack.c.l.b16 %v600
    %v642 = vunpack.c.l.b16 %v601
    %v643 = vunpack.c.l.b16 %v602
    %v644 = vunpack.c.l.b16 %v603
    %v645 = vunpack.c.l.b16 %v604
    %v646 = vunpack.c.l.b16 %v605
    %v647 = vunpack.c.l.b16 %v606
    %v648 = vunpack.c.l.b16 %v607
    %v649 = vunpack.c.l.b16 %v608
    %v650 = vunpack.c.l.b16 %v609
    %v651 = vunpack.c.l.b16 %v610
    %v652 = vunpack.c.l.b16 %v611
    %v653 = vunpack.c.l.b16 %v612
    %v654 = vpack.c.b16 %v639, %v638
    %v655 = vpack.c.b16 %v641, %v640
    %v656 = vpack.c.b16 %v643, %v642
    %v657 = vpack.c.b16 %v645, %v644
    %v658 = vpack.c.b16 %v647, %v646
    %v659 = vpack.c.b16 %v649, %v648
    %v660 = vpack.c.b16 %v651, %v650
    %v661 = vpack.c.b16 %v653, %v652
    %670 = vmatprep.subr.bf16.mxu0 0
    %671 = vmatpush1.bf16.msra.mxu0 %v654
    %672 = vmatprep.subr.bf16.mxu0 0
    %673 = vmatpush1.bf16.msra.mxu0 %v655
    %674 = vmatprep.subr.bf16.mxu0 0
    %675 = vmatpush1.bf16.msra.mxu0 %v656
    %676 = vmatprep.subr.bf16.mxu0 0
    %677 = vmatpush1.bf16.msra.mxu0 %v657
    %678 = vmatprep.subr.bf16.mxu0 0
    %679 = vmatpush1.bf16.msra.mxu0 %v658
    %680 = vmatprep.subr.bf16.mxu0 0
    %681 = vmatpush1.bf16.msra.mxu0 %v659
    %682 = vmatprep.subr.bf16.mxu0 0
    %683 = vmatpush1.bf16.msra.mxu0 %v660
    %684 = vmatprep.subr.bf16.mxu0 0
    %685 = vmatpush1.bf16.msra.mxu0 %v661
    %686 = vmatprep.subr.bf16.mxu0 0
    %687 = vmatpush1.bf16.msra.mxu0 0
    %688 = vmatprep.subr.bf16.mxu0 0
    %689 = vmatpush1.bf16.msra.mxu0 0
    %690 = vmatprep.subr.bf16.mxu0 0
    %691 = vmatpush1.bf16.msra.mxu0 0
    %692 = vmatprep.subr.bf16.mxu0 0
    %693 = vmatpush1.bf16.msra.mxu0 0
    %694 = vmatprep.subr.bf16.mxu0 0
    %695 = vmatpush1.bf16.msra.mxu0 0
    %696 = vmatprep.subr.bf16.mxu0 0
    %697 = vmatpush1.bf16.msra.mxu0 0
    %698 = vmatprep.subr.bf16.mxu0 0
    %699 = vmatpush1.bf16.msra.mxu0 0
    %700 = vmatprep.subr.bf16.mxu0 0
    %701 = vmatpush1.bf16.msra.mxu0 0
    %702 = vmatprep.mubr.bf16.mxu0 0
    %703 = vmatmul.mubr.bf16.gmra.mrb[0].mxu0 %v613
    %v704 = vpop.f32.mrb[0].mxu0
    %v705 = vadd.f32 %v620, %v704
    %v706 = vpop.f32.mrb[0].mxu0
    %v707 = vpop.f32.mrb[0].mxu0
    %v708 = vpop.f32.mrb[0].mxu0
    %709 = vdwg.mxu0
    %710 = vst.msk [vmem:[#allocation8] sm:$0xff] %vm72, %v705
    // Predicated region
    $region26: #{encnet_forward.1} parent=1 // pred_check
      _
    $region27: #{encnet_forward.1} parent=1 // pred_check_branch
      %712 = sbr.rel (0) target = $region29
    $region28: #{encnet_forward.1} parent=1 // pred_region
      %s714 = ssub.s32 128, 128
      %715 = vsyncadd [#allocation4], %s714
      %s717 = sshll.u32 [#allocation8], 4
      %s718 = int_to_ptr.vmem [resolvable:$true] %s717
      %720 = dma.vmem_to_hbm [thread:$0]  %s718, 128, %s3, [#allocation4]
    $region29: #{encnet_forward.1} parent=1 // pred_fallthru
      _
    // Predicated region
    $region30: #{encnet_forward.1} parent=1 // pred_check
      _
    $region31: #{encnet_forward.1} parent=1 // pred_check_branch
      %722 = sbr.rel (0) target = $region33
    $region32: #{encnet_forward.1} parent=1 // pred_region
      %723 = dma.done [#allocation4], 128
    $region33: #{encnet_forward.1} parent=1 // pred_fallthru
      _
    %724 = vsyncpa [#allocation3], 1
    %725 = vsyncpa [#allocation6], 1
    %726 = vsyncpa [#allocation4], 1

</llo_original>
